<compile_context>
chip_gen: v6e
topology: v6e:2x2x1
jax: 0.10.0
libtpu: 0.0.40
codegen_flags: <defaults>
</compile_context>

<pallas_src>
import functools

import numpy as np
import jax
import jax.numpy as jnp
from jax import lax
from jax.experimental import pallas as pl
from jax.experimental.pallas import tpu as pltpu


def _round_up(a, b):
    return ((a + b - 1) // b) * b


# --------------------------------------------------------------------------
# channels_last: layer norm over the trailing channel dim.
#   x block : (TR, C)   -- TR rows of the flattened (rows, C) view
#   w, b    : (1, C)
# --------------------------------------------------------------------------
def _ln_channels_last_kernel(x_ref, w_ref, b_ref, o_ref, *, eps):
    x = x_ref[...].astype(jnp.float32)                     # (TR, C)
    mean = jnp.mean(x, axis=-1, keepdims=True)
    xc = x - mean
    var = jnp.mean(xc * xc, axis=-1, keepdims=True)
    inv = lax.rsqrt(var + eps)                             # EUP
    y = xc * inv * w_ref[...] + b_ref[...]
    o_ref[...] = y.astype(o_ref.dtype)


# --------------------------------------------------------------------------
# channels_first: per-pixel normalization over the channel dim of NCHW.
#   x block : (1, C, T)  -- one batch element, all channels, T spatial pixels
#   w, b    : (C, 1)
# Lane axis = spatial (dense, 128-aligned); reduction over C is a sublane
# reduction. Stores are unmasked full-lane vst.
# --------------------------------------------------------------------------
def _ln_channels_first_kernel(x_ref, w_ref, b_ref, o_ref, *, eps):
    x = x_ref[0].astype(jnp.float32)                       # (C, T)
    mean = jnp.mean(x, axis=0, keepdims=True)              # (1, T)
    xc = x - mean
    var = jnp.mean(xc * xc, axis=0, keepdims=True)
    inv = lax.rsqrt(var + eps)                             # EUP
    y = xc * inv * w_ref[...] + b_ref[...]
    o_ref[0] = y.astype(o_ref.dtype)


# --------------------------------------------------------------------------
# Wrapper
# --------------------------------------------------------------------------
def hornet_layer_norm(x, weight, bias, *, eps=1e-6, data_format="channels_last",
                      row_tile=512, col_tile=1024):
    if data_format not in ("channels_last", "channels_first"):
        raise ValueError("data_format must be channels_last or channels_first")

    if data_format == "channels_last":
        # x: (..., C); flatten leading dims, tile rows.
        orig_shape = x.shape
        C = orig_shape[-1]
        R = int(np.prod(orig_shape[:-1]))
        xf = x.reshape(R, C)

        tr = min(row_tile, _round_up(R, 8))                # multiple of 8
        Rp = _round_up(R, tr)
        if Rp != R:
            xf = jnp.pad(xf, ((0, Rp - R), (0, 0)))        # padded rows are benign

        w2 = weight.reshape(1, C)
        b2 = bias.reshape(1, C)

        kern = functools.partial(_ln_channels_last_kernel, eps=eps)
        out = pl.pallas_call(
            kern,
            out_shape=jax.ShapeDtypeStruct((Rp, C), x.dtype),
            grid=(Rp // tr,),
            in_specs=[
                pl.BlockSpec((tr, C), lambda i: (i, 0)),
                pl.BlockSpec((1, C), lambda i: (0, 0)),
                pl.BlockSpec((1, C), lambda i: (0, 0)),
            ],
            out_specs=pl.BlockSpec((tr, C), lambda i: (i, 0)),
            compiler_params=pltpu.CompilerParams(
                dimension_semantics=("parallel",)),
        )(xf, w2, b2)
        return out[:R].reshape(orig_shape)

    # channels_first: x is (N, C, H, W)
    N, C, H, W = x.shape
    HW = H * W
    xf = x.reshape(N, C, HW)

    t = min(col_tile, _round_up(HW, 128))                  # multiple of 128
    HWp = _round_up(HW, t)
    if HWp != HW:
        xf = jnp.pad(xf, ((0, 0), (0, 0), (0, HWp - HW)))  # padded pixels are benign

    w2 = weight.reshape(C, 1)
    b2 = bias.reshape(C, 1)

    kern = functools.partial(_ln_channels_first_kernel, eps=eps)
    out = pl.pallas_call(
        kern,
        out_shape=jax.ShapeDtypeStruct((N, C, HWp), x.dtype),
        grid=(N, HWp // t),
        in_specs=[
            pl.BlockSpec((1, C, t), lambda n, j: (n, 0, j)),
            pl.BlockSpec((C, 1), lambda n, j: (0, 0)),
            pl.BlockSpec((C, 1), lambda n, j: (0, 0)),
        ],
        out_specs=pl.BlockSpec((1, C, t), lambda n, j: (n, 0, j)),
        compiler_params=pltpu.CompilerParams(
            dimension_semantics=("parallel", "parallel")),
    )(xf, w2, b2)
    return out[:, :, :HW].reshape(N, C, H, W)


# --------------------------------------------------------------------------
# Pure-JAX references (mirror the PyTorch forward exactly)
# --------------------------------------------------------------------------
def ref_channels_last(x, w, b, eps):
    mean = x.mean(-1, keepdims=True)
    var = ((x - mean) ** 2).mean(-1, keepdims=True)
    return (x - mean) / jnp.sqrt(var + eps) * w + b


def ref_channels_first(x, w, b, eps):
    u = x.mean(1, keepdims=True)
    s = ((x - u) ** 2).mean(1, keepdims=True)
    xn = (x - u) / jnp.sqrt(s + eps)
    return w[None, :, None, None] * xn + b[None, :, None, None]


if __name__ == "__main__":
    eps = 1e-6
    key = jax.random.PRNGKey(0)
    k1, k2, k3, k4, k5, k6 = jax.random.split(key, 6)

    # ---- channels_last: (N, H, W, C) = (2, 16, 16, 32) ----
    C_last = 32
    x_last = jax.random.normal(k1, (2, 16, 16, C_last), jnp.float32)
    w_last = 1.0 + 0.1 * jax.random.normal(k2, (C_last,), jnp.float32)
    b_last = 0.1 * jax.random.normal(k3, (C_last,), jnp.float32)

    out_last = hornet_layer_norm(x_last, w_last, b_last, eps=eps,
                                 data_format="channels_last")
    out_last = jax.block_until_ready(out_last)
    ref_last = ref_channels_last(x_last, w_last, b_last, eps)
    np.testing.assert_allclose(np.asarray(out_last), np.asarray(ref_last),
                               rtol=2e-5, atol=2e-5)

    # ---- channels_first: (N, C, H, W) = (2, 4, 16, 16) ----
    C_first = 4
    x_first = jax.random.normal(k4, (2, C_first, 16, 16), jnp.float32)
    w_first = 1.0 + 0.1 * jax.random.normal(k5, (C_first,), jnp.float32)
    b_first = 0.1 * jax.random.normal(k6, (C_first,), jnp.float32)

    out_first = hornet_layer_norm(x_first, w_first, b_first, eps=eps,
                                  data_format="channels_first")
    out_first = jax.block_until_ready(out_first)
    ref_first = ref_channels_first(x_first, w_first, b_first, eps)
    np.testing.assert_allclose(np.asarray(out_first), np.asarray(ref_first),
                               rtol=2e-5, atol=2e-5)

    print("KERNEL_OK")
</pallas_src>

<mosaic_0001>
module attributes {stable_mosaic.version = 11 : i64} {
  func.func @_ln_channels_last_kernel(%arg0: i32, %arg1: memref<512x32xf32, #tpu.memory_space<vmem>>, %arg2: memref<1x32xf32, #tpu.memory_space<vmem>>, %arg3: memref<1x32xf32, #tpu.memory_space<vmem>>, %arg4: memref<512x32xf32, #tpu.memory_space<vmem>>) attributes {dimension_semantics = [#tpu.dimension_semantics<parallel>], iteration_bounds = array<i64: 1>, scalar_prefetch = 0 : i64, scratch_operands = 0 : i64, tpu.core_type = #tpu.core_type<tc>, window_params = [{transform_indices = @transform_0, window_bounds = array<i64: 512, 32>}, {pipeline_mode = #tpu.pipeline_mode<synchronous>, transform_indices = @transform_1, window_bounds = array<i64: 1, 32>}, {pipeline_mode = #tpu.pipeline_mode<synchronous>, transform_indices = @transform_2, window_bounds = array<i64: 1, 32>}, {transform_indices = @transform_3, window_bounds = array<i64: 512, 32>}]} {
    %c0 = arith.constant 0 : index
    %c0_0 = arith.constant 0 : index
    %0 = vector.load %arg1[%c0, %c0_0] : memref<512x32xf32, #tpu.memory_space<vmem>>, vector<512x32xf32>
    %cst = arith.constant dense<0.000000e+00> : vector<512xf32>
    %1 = vector.multi_reduction <add>, %0, %cst [1] : vector<512x32xf32> to vector<512xf32>
    %2 = vector.shape_cast %1 : vector<512xf32> to vector<512x1xf32>
    %cst_1 = arith.constant 3.200000e+01 : f32
    %3 = vector.broadcast %cst_1 : f32 to vector<512x1xf32>
    %4 = arith.divf %2, %3 : vector<512x1xf32>
    %5 = vector.broadcast %4 : vector<512x1xf32> to vector<512x32xf32>
    %6 = arith.subf %0, %5 : vector<512x32xf32>
    %7 = arith.mulf %6, %6 : vector<512x32xf32>
    %cst_2 = arith.constant dense<0.000000e+00> : vector<512xf32>
    %8 = vector.multi_reduction <add>, %7, %cst_2 [1] : vector<512x32xf32> to vector<512xf32>
    %9 = vector.shape_cast %8 : vector<512xf32> to vector<512x1xf32>
    %cst_3 = arith.constant 3.200000e+01 : f32
    %10 = vector.broadcast %cst_3 : f32 to vector<512x1xf32>
    %11 = arith.divf %9, %10 : vector<512x1xf32>
    %cst_4 = arith.constant 9.99999997E-7 : f32
    %12 = vector.broadcast %cst_4 : f32 to vector<512x1xf32>
    %13 = arith.addf %11, %12 : vector<512x1xf32>
    %14 = math.rsqrt %13 : vector<512x1xf32>
    %15 = vector.broadcast %14 : vector<512x1xf32> to vector<512x32xf32>
    %16 = arith.mulf %6, %15 : vector<512x32xf32>
    %c0_5 = arith.constant 0 : index
    %c0_6 = arith.constant 0 : index
    %17 = vector.load %arg2[%c0_5, %c0_6] : memref<1x32xf32, #tpu.memory_space<vmem>>, vector<1x32xf32>
    %18 = vector.broadcast %17 : vector<1x32xf32> to vector<512x32xf32>
    %19 = arith.mulf %16, %18 : vector<512x32xf32>
    %c0_7 = arith.constant 0 : index
    %c0_8 = arith.constant 0 : index
    %20 = vector.load %arg3[%c0_7, %c0_8] : memref<1x32xf32, #tpu.memory_space<vmem>>, vector<1x32xf32>
    %21 = vector.broadcast %20 : vector<1x32xf32> to vector<512x32xf32>
    %22 = arith.addf %19, %21 : vector<512x32xf32>
    %c0_9 = arith.constant 0 : index
    %c0_10 = arith.constant 0 : index
    %23 = vector.load %arg4[%c0_9, %c0_10] : memref<512x32xf32, #tpu.memory_space<vmem>>, vector<512x32xf32>
    tpu.vector_store %arg4[%c0_9, %c0_10], %22 {strides = array<i32>} : memref<512x32xf32, #tpu.memory_space<vmem>>, vector<512x32xf32>,
    return
  }
  func.func @transform_0(%arg0: i32) -> (i32, i32) {
    %c0_i32 = arith.constant 0 : i32
    %c0_i32_0 = arith.constant 0 : i32
    return %arg0, %c0_i32 : i32, i32
  }
  func.func @transform_1(%arg0: i32) -> (i32, i32) {
    %c0_i32 = arith.constant 0 : i32
    %c0_i32_0 = arith.constant 0 : i32
    %c0_i32_1 = arith.constant 0 : i32
    return %c0_i32, %c0_i32_0 : i32, i32
  }
  func.func @transform_2(%arg0: i32) -> (i32, i32) {
    %c0_i32 = arith.constant 0 : i32
    %c0_i32_0 = arith.constant 0 : i32
    %c0_i32_1 = arith.constant 0 : i32
    return %c0_i32, %c0_i32_0 : i32, i32
  }
  func.func @transform_3(%arg0: i32) -> (i32, i32) {
    %c0_i32 = arith.constant 0 : i32
    %c0_i32_0 = arith.constant 0 : i32
    return %arg0, %c0_i32 : i32, i32
  }
}

</mosaic_0001>

<llo_original>
// kernel: tpu_custom_call.1
$region0: #{tpu_custom_call.1}
  #allocation0 [shape = 'u32[]', space=smem, size = 0x4, offset = 0x4, fixed_abs, tag = 'smem constant byte address 0x4 - core index']
  #allocation1 [shape = 'u32[144,128]{1,0:T(1,128)}', space=vmem, size = 0x12000, scoped, tag = 'internal scratch']
  %s0 = inlined_call_operand.vmem [shape: f32[512,32], index: 0, kind: input, shape index: {}]
  %s1 = inlined_call_operand.vmem [shape: f32[1,32], index: 1, kind: input, shape index: {}]
  %s2 = inlined_call_operand.vmem [shape: f32[1,32], index: 2, kind: input, shape index: {}]
  %s3 = inlined_call_operand.vmem [shape: f32[512,32], index: 3, kind: output, shape index: {}]
  %s4 = sld [smem:[#allocation0]]
  $region22: #{tpu_custom_call.1} parent=0
    _
  %s6 = ssub.s32 1, %s4
  %s7 = scalar_select 0, %s6, %s4
  // Predicated region
  $region2: #{tpu_custom_call.1} parent=0 // pred_check
    _
  $region3: #{tpu_custom_call.1} parent=0 // pred_check_branch
    %9 = sbr.rel (0) target = $region5
  $region4: #{tpu_custom_call.1} parent=0 // pred_region
    _
  $region5: #{tpu_custom_call.1} parent=0 // pred_fallthru
    _
  // Predicated region
  $region6: #{tpu_custom_call.1} parent=0 // pred_check
    _
  $region7: #{tpu_custom_call.1} parent=0 // pred_check_branch
    %11 = sbr.rel (0) target = $region9
  $region8: #{tpu_custom_call.1} parent=0 // pred_region
    _
  $region9: #{tpu_custom_call.1} parent=0 // pred_fallthru
    _
  // Predicated region
  $region10: #{tpu_custom_call.1} parent=0 // pred_check
    _
  $region11: #{tpu_custom_call.1} parent=0 // pred_check_branch
    %13 = sbr.rel (0) target = $region13
  $region12: #{tpu_custom_call.1} parent=0 // pred_region
    _
  $region13: #{tpu_custom_call.1} parent=0 // pred_fallthru
    _
  %v14 = vld [vmem:[%s0] sm:$0xff]
  %v15 = vld [vmem:[%s0 + $0x8] sm:$0xff]
  %v16 = vld [vmem:[%s0 + $0x10] sm:$0xff]
  %v17 = vld [vmem:[%s0 + $0x18] sm:$0xff]
  %v18 = vld [vmem:[%s0 + $0x20] sm:$0xff]
  %v19 = vld [vmem:[%s0 + $0x28] sm:$0xff]
  %v20 = vld [vmem:[%s0 + $0x30] sm:$0xff]
  %v21 = vld [vmem:[%s0 + $0x38] sm:$0xff]
  %v22 = vld [vmem:[%s0 + $0x40] sm:$0xff]
  %v23 = vld [vmem:[%s0 + $0x48] sm:$0xff]
  %v24 = vld [vmem:[%s0 + $0x50] sm:$0xff]
  %v25 = vld [vmem:[%s0 + $0x58] sm:$0xff]
  %v26 = vld [vmem:[%s0 + $0x60] sm:$0xff]
  %v27 = vld [vmem:[%s0 + $0x68] sm:$0xff]
  %v28 = vld [vmem:[%s0 + $0x70] sm:$0xff]
  %v29 = vld [vmem:[%s0 + $0x78] sm:$0xff]
  %v30 = vld [vmem:[%s0 + $0x80] sm:$0xff]
  %v31 = vld [vmem:[%s0 + $0x88] sm:$0xff]
  %v32 = vld [vmem:[%s0 + $0x90] sm:$0xff]
  %v33 = vld [vmem:[%s0 + $0x98] sm:$0xff]
  %v34 = vld [vmem:[%s0 + $0xa0] sm:$0xff]
  %v35 = vld [vmem:[%s0 + $0xa8] sm:$0xff]
  %v36 = vld [vmem:[%s0 + $0xb0] sm:$0xff]
  %v37 = vld [vmem:[%s0 + $0xb8] sm:$0xff]
  %v38 = vld [vmem:[%s0 + $0xc0] sm:$0xff]
  %v39 = vld [vmem:[%s0 + $0xc8] sm:$0xff]
  %v40 = vld [vmem:[%s0 + $0xd0] sm:$0xff]
  %v41 = vld [vmem:[%s0 + $0xd8] sm:$0xff]
  %v42 = vld [vmem:[%s0 + $0xe0] sm:$0xff]
  %v43 = vld [vmem:[%s0 + $0xe8] sm:$0xff]
  %v44 = vld [vmem:[%s0 + $0xf0] sm:$0xff]
  %v45 = vld [vmem:[%s0 + $0xf8] sm:$0xff]
  %v46 = vld [vmem:[%s0 + $0x100] sm:$0xff]
  %v47 = vld [vmem:[%s0 + $0x108] sm:$0xff]
  %v48 = vld [vmem:[%s0 + $0x110] sm:$0xff]
  %v49 = vld [vmem:[%s0 + $0x118] sm:$0xff]
  %v50 = vld [vmem:[%s0 + $0x120] sm:$0xff]
  %v51 = vld [vmem:[%s0 + $0x128] sm:$0xff]
  %v52 = vld [vmem:[%s0 + $0x130] sm:$0xff]
  %v53 = vld [vmem:[%s0 + $0x138] sm:$0xff]
  %v54 = vld [vmem:[%s0 + $0x140] sm:$0xff]
  %v55 = vld [vmem:[%s0 + $0x148] sm:$0xff]
  %v56 = vld [vmem:[%s0 + $0x150] sm:$0xff]
  %v57 = vld [vmem:[%s0 + $0x158] sm:$0xff]
  %v58 = vld [vmem:[%s0 + $0x160] sm:$0xff]
  %v59 = vld [vmem:[%s0 + $0x168] sm:$0xff]
  %v60 = vld [vmem:[%s0 + $0x170] sm:$0xff]
  %v61 = vld [vmem:[%s0 + $0x178] sm:$0xff]
  %v62 = vld [vmem:[%s0 + $0x180] sm:$0xff]
  %v63 = vld [vmem:[%s0 + $0x188] sm:$0xff]
  %v64 = vld [vmem:[%s0 + $0x190] sm:$0xff]
  %v65 = vld [vmem:[%s0 + $0x198] sm:$0xff]
  %v66 = vld [vmem:[%s0 + $0x1a0] sm:$0xff]
  %v67 = vld [vmem:[%s0 + $0x1a8] sm:$0xff]
  %v68 = vld [vmem:[%s0 + $0x1b0] sm:$0xff]
  %v69 = vld [vmem:[%s0 + $0x1b8] sm:$0xff]
  %v70 = vld [vmem:[%s0 + $0x1c0] sm:$0xff]
  %v71 = vld [vmem:[%s0 + $0x1c8] sm:$0xff]
  %v72 = vld [vmem:[%s0 + $0x1d0] sm:$0xff]
  %v73 = vld [vmem:[%s0 + $0x1d8] sm:$0xff]
  %v74 = vld [vmem:[%s0 + $0x1e0] sm:$0xff]
  %v75 = vld [vmem:[%s0 + $0x1e8] sm:$0xff]
  %v76 = vld [vmem:[%s0 + $0x1f0] sm:$0xff]
  %v77 = vld [vmem:[%s0 + $0x1f8] sm:$0xff]
  %vm78 = vcmask 261120
  %v79 = vsel %vm78, %v14, 0.0
  %80 = vadd.xlane.f32.xlu0 %v79
  %v81 = vpop.xlane.xlu0 %80
  %v82 = vsel %vm78, %v15, 0.0
  %83 = vadd.xlane.f32.xlu0 %v82
  %v84 = vpop.xlane.xlu0 %83
  %v85 = vsel %vm78, %v16, 0.0
  %86 = vadd.xlane.f32.xlu0 %v85
  %v87 = vpop.xlane.xlu0 %86
  %v88 = vsel %vm78, %v17, 0.0
  %89 = vadd.xlane.f32.xlu0 %v88
  %v90 = vpop.xlane.xlu0 %89
  %v91 = vsel %vm78, %v18, 0.0
  %92 = vadd.xlane.f32.xlu0 %v91
  %v93 = vpop.xlane.xlu0 %92
  %v94 = vsel %vm78, %v19, 0.0
  %95 = vadd.xlane.f32.xlu0 %v94
  %v96 = vpop.xlane.xlu0 %95
  %v97 = vsel %vm78, %v20, 0.0
  %98 = vadd.xlane.f32.xlu0 %v97
  %v99 = vpop.xlane.xlu0 %98
  %v100 = vsel %vm78, %v21, 0.0
  %101 = vadd.xlane.f32.xlu0 %v100
  %v102 = vpop.xlane.xlu0 %101
  %v103 = vsel %vm78, %v22, 0.0
  %104 = vadd.xlane.f32.xlu0 %v103
  %v105 = vpop.xlane.xlu0 %104
  %v106 = vsel %vm78, %v23, 0.0
  %107 = vadd.xlane.f32.xlu0 %v106
  %v108 = vpop.xlane.xlu0 %107
  %v109 = vsel %vm78, %v24, 0.0
  %110 = vadd.xlane.f32.xlu0 %v109
  %v111 = vpop.xlane.xlu0 %110
  %v112 = vsel %vm78, %v25, 0.0
  %113 = vadd.xlane.f32.xlu0 %v112
  %v114 = vpop.xlane.xlu0 %113
  %v115 = vsel %vm78, %v26, 0.0
  %116 = vadd.xlane.f32.xlu0 %v115
  %v117 = vpop.xlane.xlu0 %116
  %v118 = vsel %vm78, %v27, 0.0
  %119 = vadd.xlane.f32.xlu0 %v118
  %v120 = vpop.xlane.xlu0 %119
  %v121 = vsel %vm78, %v28, 0.0
  %122 = vadd.xlane.f32.xlu0 %v121
  %v123 = vpop.xlane.xlu0 %122
  %v124 = vsel %vm78, %v29, 0.0
  %125 = vadd.xlane.f32.xlu0 %v124
  %v126 = vpop.xlane.xlu0 %125
  %v127 = vsel %vm78, %v30, 0.0
  %128 = vadd.xlane.f32.xlu0 %v127
  %v129 = vpop.xlane.xlu0 %128
  %v130 = vsel %vm78, %v31, 0.0
  %131 = vadd.xlane.f32.xlu0 %v130
  %v132 = vpop.xlane.xlu0 %131
  %v133 = vsel %vm78, %v32, 0.0
  %134 = vadd.xlane.f32.xlu0 %v133
  %v135 = vpop.xlane.xlu0 %134
  %v136 = vsel %vm78, %v33, 0.0
  %137 = vadd.xlane.f32.xlu0 %v136
  %v138 = vpop.xlane.xlu0 %137
  %v139 = vsel %vm78, %v34, 0.0
  %140 = vadd.xlane.f32.xlu0 %v139
  %v141 = vpop.xlane.xlu0 %140
  %v142 = vsel %vm78, %v35, 0.0
  %143 = vadd.xlane.f32.xlu0 %v142
  %v144 = vpop.xlane.xlu0 %143
  %v145 = vsel %vm78, %v36, 0.0
  %146 = vadd.xlane.f32.xlu0 %v145
  %v147 = vpop.xlane.xlu0 %146
  %v148 = vsel %vm78, %v37, 0.0
  %149 = vadd.xlane.f32.xlu0 %v148
  %v150 = vpop.xlane.xlu0 %149
  %v151 = vsel %vm78, %v38, 0.0
  %152 = vadd.xlane.f32.xlu0 %v151
  %v153 = vpop.xlane.xlu0 %152
  %v154 = vsel %vm78, %v39, 0.0
  %155 = vadd.xlane.f32.xlu0 %v154
  %v156 = vpop.xlane.xlu0 %155
  %v157 = vsel %vm78, %v40, 0.0
  %158 = vadd.xlane.f32.xlu0 %v157
  %v159 = vpop.xlane.xlu0 %158
  %v160 = vsel %vm78, %v41, 0.0
  %161 = vadd.xlane.f32.xlu0 %v160
  %v162 = vpop.xlane.xlu0 %161
  %v163 = vsel %vm78, %v42, 0.0
  %164 = vadd.xlane.f32.xlu0 %v163
  %v165 = vpop.xlane.xlu0 %164
  %v166 = vsel %vm78, %v43, 0.0
  %167 = vadd.xlane.f32.xlu0 %v166
  %v168 = vpop.xlane.xlu0 %167
  %v169 = vsel %vm78, %v44, 0.0
  %170 = vadd.xlane.f32.xlu0 %v169
  %v171 = vpop.xlane.xlu0 %170
  %v172 = vsel %vm78, %v45, 0.0
  %173 = vadd.xlane.f32.xlu0 %v172
  %v174 = vpop.xlane.xlu0 %173
  %v175 = vsel %vm78, %v46, 0.0
  %176 = vadd.xlane.f32.xlu0 %v175
  %v177 = vpop.xlane.xlu0 %176
  %v178 = vsel %vm78, %v47, 0.0
  %179 = vadd.xlane.f32.xlu0 %v178
  %v180 = vpop.xlane.xlu0 %179
  %v181 = vsel %vm78, %v48, 0.0
  %182 = vadd.xlane.f32.xlu0 %v181
  %v183 = vpop.xlane.xlu0 %182
  %v184 = vsel %vm78, %v49, 0.0
  %185 = vadd.xlane.f32.xlu0 %v184
  %v186 = vpop.xlane.xlu0 %185
  %v187 = vsel %vm78, %v50, 0.0
  %188 = vadd.xlane.f32.xlu0 %v187
  %v189 = vpop.xlane.xlu0 %188
  %v190 = vsel %vm78, %v51, 0.0
  %191 = vadd.xlane.f32.xlu0 %v190
  %v192 = vpop.xlane.xlu0 %191
  %v193 = vsel %vm78, %v52, 0.0
  %194 = vadd.xlane.f32.xlu0 %v193
  %v195 = vpop.xlane.xlu0 %194
  %v196 = vsel %vm78, %v53, 0.0
  %197 = vadd.xlane.f32.xlu0 %v196
  %v198 = vpop.xlane.xlu0 %197
  %v199 = vsel %vm78, %v54, 0.0
  %200 = vadd.xlane.f32.xlu0 %v199
  %v201 = vpop.xlane.xlu0 %200
  %v202 = vsel %vm78, %v55, 0.0
  %203 = vadd.xlane.f32.xlu0 %v202
  %v204 = vpop.xlane.xlu0 %203
  %v205 = vsel %vm78, %v56, 0.0
  %206 = vadd.xlane.f32.xlu0 %v205
  %v207 = vpop.xlane.xlu0 %206
  %v208 = vsel %vm78, %v57, 0.0
  %209 = vadd.xlane.f32.xlu0 %v208
  %v210 = vpop.xlane.xlu0 %209
  %v211 = vsel %vm78, %v58, 0.0
  %212 = vadd.xlane.f32.xlu0 %v211
  %v213 = vpop.xlane.xlu0 %212
  %v214 = vsel %vm78, %v59, 0.0
  %215 = vadd.xlane.f32.xlu0 %v214
  %v216 = vpop.xlane.xlu0 %215
  %v217 = vsel %vm78, %v60, 0.0
  %218 = vadd.xlane.f32.xlu0 %v217
  %v219 = vpop.xlane.xlu0 %218
  %v220 = vsel %vm78, %v61, 0.0
  %221 = vadd.xlane.f32.xlu0 %v220
  %v222 = vpop.xlane.xlu0 %221
  %v223 = vsel %vm78, %v62, 0.0
  %224 = vadd.xlane.f32.xlu0 %v223
  %v225 = vpop.xlane.xlu0 %224
  %v226 = vsel %vm78, %v63, 0.0
  %227 = vadd.xlane.f32.xlu0 %v226
  %v228 = vpop.xlane.xlu0 %227
  %v229 = vsel %vm78, %v64, 0.0
  %230 = vadd.xlane.f32.xlu0 %v229
  %v231 = vpop.xlane.xlu0 %230
  %v232 = vsel %vm78, %v65, 0.0
  %233 = vadd.xlane.f32.xlu0 %v232
  %v234 = vpop.xlane.xlu0 %233
  %v235 = vsel %vm78, %v66, 0.0
  %236 = vadd.xlane.f32.xlu0 %v235
  %v237 = vpop.xlane.xlu0 %236
  %v238 = vsel %vm78, %v67, 0.0
  %239 = vadd.xlane.f32.xlu0 %v238
  %v240 = vpop.xlane.xlu0 %239
  %v241 = vsel %vm78, %v68, 0.0
  %242 = vadd.xlane.f32.xlu0 %v241
  %v243 = vpop.xlane.xlu0 %242
  %v244 = vsel %vm78, %v69, 0.0
  %245 = vadd.xlane.f32.xlu0 %v244
  %v246 = vpop.xlane.xlu0 %245
  %v247 = vsel %vm78, %v70, 0.0
  %248 = vadd.xlane.f32.xlu0 %v247
  %v249 = vpop.xlane.xlu0 %248
  %v250 = vsel %vm78, %v71, 0.0
  %251 = vadd.xlane.f32.xlu0 %v250
  %v252 = vpop.xlane.xlu0 %251
  %v253 = vsel %vm78, %v72, 0.0
  %254 = vadd.xlane.f32.xlu0 %v253
  %v255 = vpop.xlane.xlu0 %254
  %v256 = vsel %vm78, %v73, 0.0
  %257 = vadd.xlane.f32.xlu0 %v256
  %v258 = vpop.xlane.xlu0 %257
  %v259 = vsel %vm78, %v74, 0.0
  %260 = vadd.xlane.f32.xlu0 %v259
  %v261 = vpop.xlane.xlu0 %260
  %v262 = vsel %vm78, %v75, 0.0
  %263 = vadd.xlane.f32.xlu0 %v262
  %v264 = vpop.xlane.xlu0 %263
  %v265 = vsel %vm78, %v76, 0.0
  %266 = vadd.xlane.f32.xlu0 %v265
  %v267 = vpop.xlane.xlu0 %266
  %v268 = vsel %vm78, %v77, 0.0
  %269 = vadd.xlane.f32.xlu0 %v268
  %v270 = vpop.xlane.xlu0 %269
  %v271 = vrcp.pop 32.0
  %v272 = vmul.f32 %v81, %v271
  %v273 = vmul.f32 %v84, %v271
  %v274 = vmul.f32 %v87, %v271
  %v275 = vmul.f32 %v90, %v271
  %v276 = vmul.f32 %v93, %v271
  %v277 = vmul.f32 %v96, %v271
  %v278 = vmul.f32 %v99, %v271
  %v279 = vmul.f32 %v102, %v271
  %v280 = vmul.f32 %v105, %v271
  %v281 = vmul.f32 %v108, %v271
  %v282 = vmul.f32 %v111, %v271
  %v283 = vmul.f32 %v114, %v271
  %v284 = vmul.f32 %v117, %v271
  %v285 = vmul.f32 %v120, %v271
  %v286 = vmul.f32 %v123, %v271
  %v287 = vmul.f32 %v126, %v271
  %v288 = vmul.f32 %v129, %v271
  %v289 = vmul.f32 %v132, %v271
  %v290 = vmul.f32 %v135, %v271
  %v291 = vmul.f32 %v138, %v271
  %v292 = vmul.f32 %v141, %v271
  %v293 = vmul.f32 %v144, %v271
  %v294 = vmul.f32 %v147, %v271
  %v295 = vmul.f32 %v150, %v271
  %v296 = vmul.f32 %v153, %v271
  %v297 = vmul.f32 %v156, %v271
  %v298 = vmul.f32 %v159, %v271
  %v299 = vmul.f32 %v162, %v271
  %v300 = vmul.f32 %v165, %v271
  %v301 = vmul.f32 %v168, %v271
  %v302 = vmul.f32 %v171, %v271
  %v303 = vmul.f32 %v174, %v271
  %v304 = vmul.f32 %v177, %v271
  %v305 = vmul.f32 %v180, %v271
  %v306 = vmul.f32 %v183, %v271
  %v307 = vmul.f32 %v186, %v271
  %v308 = vmul.f32 %v189, %v271
  %v309 = vmul.f32 %v192, %v271
  %v310 = vmul.f32 %v195, %v271
  %v311 = vmul.f32 %v198, %v271
  %v312 = vmul.f32 %v201, %v271
  %v313 = vmul.f32 %v204, %v271
  %v314 = vmul.f32 %v207, %v271
  %v315 = vmul.f32 %v210, %v271
  %v316 = vmul.f32 %v213, %v271
  %v317 = vmul.f32 %v216, %v271
  %v318 = vmul.f32 %v219, %v271
  %v319 = vmul.f32 %v222, %v271
  %v320 = vmul.f32 %v225, %v271
  %v321 = vmul.f32 %v228, %v271
  %v322 = vmul.f32 %v231, %v271
  %v323 = vmul.f32 %v234, %v271
  %v324 = vmul.f32 %v237, %v271
  %v325 = vmul.f32 %v240, %v271
  %v326 = vmul.f32 %v243, %v271
  %v327 = vmul.f32 %v246, %v271
  %v328 = vmul.f32 %v249, %v271
  %v329 = vmul.f32 %v252, %v271
  %v330 = vmul.f32 %v255, %v271
  %v331 = vmul.f32 %v258, %v271
  %v332 = vmul.f32 %v261, %v271
  %v333 = vmul.f32 %v264, %v271
  %v334 = vmul.f32 %v267, %v271
  %v335 = vmul.f32 %v270, %v271
  %v336 = vsub.f32 %v14, %v272
  %v337 = vsub.f32 %v15, %v273
  %v338 = vsub.f32 %v16, %v274
  %v339 = vsub.f32 %v17, %v275
  %v340 = vsub.f32 %v18, %v276
  %v341 = vsub.f32 %v19, %v277
  %v342 = vsub.f32 %v20, %v278
  %v343 = vsub.f32 %v21, %v279
  %v344 = vsub.f32 %v22, %v280
  %v345 = vsub.f32 %v23, %v281
  %v346 = vsub.f32 %v24, %v282
  %v347 = vsub.f32 %v25, %v283
  %v348 = vsub.f32 %v26, %v284
  %v349 = vsub.f32 %v27, %v285
  %v350 = vsub.f32 %v28, %v286
  %v351 = vsub.f32 %v29, %v287
  %v352 = vsub.f32 %v30, %v288
  %v353 = vsub.f32 %v31, %v289
  %v354 = vsub.f32 %v32, %v290
  %v355 = vsub.f32 %v33, %v291
  %v356 = vsub.f32 %v34, %v292
  %v357 = vsub.f32 %v35, %v293
  %v358 = vsub.f32 %v36, %v294
  %v359 = vsub.f32 %v37, %v295
  %v360 = vsub.f32 %v38, %v296
  %v361 = vsub.f32 %v39, %v297
  %v362 = vsub.f32 %v40, %v298
  %v363 = vsub.f32 %v41, %v299
  %v364 = vsub.f32 %v42, %v300
  %v365 = vsub.f32 %v43, %v301
  %v366 = vsub.f32 %v44, %v302
  %v367 = vsub.f32 %v45, %v303
  %v368 = vsub.f32 %v46, %v304
  %v369 = vsub.f32 %v47, %v305
  %v370 = vsub.f32 %v48, %v306
  %v371 = vsub.f32 %v49, %v307
  %v372 = vsub.f32 %v50, %v308
  %v373 = vsub.f32 %v51, %v309
  %v374 = vsub.f32 %v52, %v310
  %v375 = vsub.f32 %v53, %v311
  %v376 = vsub.f32 %v54, %v312
  %v377 = vsub.f32 %v55, %v313
  %v378 = vsub.f32 %v56, %v314
  %v379 = vsub.f32 %v57, %v315
  %v380 = vsub.f32 %v58, %v316
  %v381 = vsub.f32 %v59, %v317
  %v382 = vsub.f32 %v60, %v318
  %v383 = vsub.f32 %v61, %v319
  %v384 = vsub.f32 %v62, %v320
  %v385 = vsub.f32 %v63, %v321
  %v386 = vsub.f32 %v64, %v322
  %v387 = vsub.f32 %v65, %v323
  %v388 = vsub.f32 %v66, %v324
  %v389 = vsub.f32 %v67, %v325
  %v390 = vsub.f32 %v68, %v326
  %v391 = vsub.f32 %v69, %v327
  %v392 = vsub.f32 %v70, %v328
  %v393 = vsub.f32 %v71, %v329
  %v394 = vsub.f32 %v72, %v330
  %v395 = vsub.f32 %v73, %v331
  %v396 = vsub.f32 %v74, %v332
  %v397 = vsub.f32 %v75, %v333
  %v398 = vsub.f32 %v76, %v334
  %v399 = vsub.f32 %v77, %v335
  %v400 = vmul.f32 %v336, %v336
  %v401 = vmul.f32 %v337, %v337
  %v402 = vmul.f32 %v338, %v338
  %v403 = vmul.f32 %v339, %v339
  %v404 = vmul.f32 %v340, %v340
  %v405 = vmul.f32 %v341, %v341
  %v406 = vmul.f32 %v342, %v342
  %v407 = vmul.f32 %v343, %v343
  %v408 = vmul.f32 %v344, %v344
  %v409 = vmul.f32 %v345, %v345
  %v410 = vmul.f32 %v346, %v346
  %v411 = vmul.f32 %v347, %v347
  %v412 = vmul.f32 %v348, %v348
  %v413 = vmul.f32 %v349, %v349
  %v414 = vmul.f32 %v350, %v350
  %v415 = vmul.f32 %v351, %v351
  %v416 = vmul.f32 %v352, %v352
  %v417 = vmul.f32 %v353, %v353
  %v418 = vmul.f32 %v354, %v354
  %v419 = vmul.f32 %v355, %v355
  %v420 = vmul.f32 %v356, %v356
  %v421 = vmul.f32 %v357, %v357
  %v422 = vmul.f32 %v358, %v358
  %v423 = vmul.f32 %v359, %v359
  %v424 = vmul.f32 %v360, %v360
  %v425 = vmul.f32 %v361, %v361
  %v426 = vmul.f32 %v362, %v362
  %v427 = vmul.f32 %v363, %v363
  %v428 = vmul.f32 %v364, %v364
  %v429 = vmul.f32 %v365, %v365
  %v430 = vmul.f32 %v366, %v366
  %v431 = vmul.f32 %v367, %v367
  %v432 = vmul.f32 %v368, %v368
  %v433 = vmul.f32 %v369, %v369
  %v434 = vmul.f32 %v370, %v370
  %v435 = vmul.f32 %v371, %v371
  %v436 = vmul.f32 %v372, %v372
  %v437 = vmul.f32 %v373, %v373
  %v438 = vmul.f32 %v374, %v374
  %v439 = vmul.f32 %v375, %v375
  %v440 = vmul.f32 %v376, %v376
  %v441 = vmul.f32 %v377, %v377
  %v442 = vmul.f32 %v378, %v378
  %v443 = vmul.f32 %v379, %v379
  %v444 = vmul.f32 %v380, %v380
  %v445 = vmul.f32 %v381, %v381
  %v446 = vmul.f32 %v382, %v382
  %v447 = vmul.f32 %v383, %v383
  %v448 = vmul.f32 %v384, %v384
  %v449 = vmul.f32 %v385, %v385
  %v450 = vmul.f32 %v386, %v386
  %v451 = vmul.f32 %v387, %v387
  %v452 = vmul.f32 %v388, %v388
  %v453 = vmul.f32 %v389, %v389
  %v454 = vmul.f32 %v390, %v390
  %v455 = vmul.f32 %v391, %v391
  %v456 = vmul.f32 %v392, %v392
  %v457 = vmul.f32 %v393, %v393
  %v458 = vmul.f32 %v394, %v394
  %v459 = vmul.f32 %v395, %v395
  %v460 = vmul.f32 %v396, %v396
  %v461 = vmul.f32 %v397, %v397
  %v462 = vmul.f32 %v398, %v398
  %v463 = vmul.f32 %v399, %v399
  %v464 = vsel %vm78, %v400, 0.0
  %465 = vadd.xlane.f32.xlu0 %v464
  %v466 = vpop.xlane.xlu0 %465
  %v467 = vsel %vm78, %v401, 0.0
  %468 = vadd.xlane.f32.xlu0 %v467
  %v469 = vpop.xlane.xlu0 %468
  %v470 = vsel %vm78, %v402, 0.0
  %471 = vadd.xlane.f32.xlu0 %v470
  %v472 = vpop.xlane.xlu0 %471
  %v473 = vsel %vm78, %v403, 0.0
  %474 = vadd.xlane.f32.xlu0 %v473
  %v475 = vpop.xlane.xlu0 %474
  %v476 = vsel %vm78, %v404, 0.0
  %477 = vadd.xlane.f32.xlu0 %v476
  %v478 = vpop.xlane.xlu0 %477
  %v479 = vsel %vm78, %v405, 0.0
  %480 = vadd.xlane.f32.xlu0 %v479
  %v481 = vpop.xlane.xlu0 %480
  %v482 = vsel %vm78, %v406, 0.0
  %483 = vadd.xlane.f32.xlu0 %v482
  %v484 = vpop.xlane.xlu0 %483
  %v485 = vsel %vm78, %v407, 0.0
  %486 = vadd.xlane.f32.xlu0 %v485
  %v487 = vpop.xlane.xlu0 %486
  %v488 = vsel %vm78, %v408, 0.0
  %489 = vadd.xlane.f32.xlu0 %v488
  %v490 = vpop.xlane.xlu0 %489
  %v491 = vsel %vm78, %v409, 0.0
  %492 = vadd.xlane.f32.xlu0 %v491
  %v493 = vpop.xlane.xlu0 %492
  %v494 = vsel %vm78, %v410, 0.0
  %495 = vadd.xlane.f32.xlu0 %v494
  %v496 = vpop.xlane.xlu0 %495
  %v497 = vsel %vm78, %v411, 0.0
  %498 = vadd.xlane.f32.xlu0 %v497
  %v499 = vpop.xlane.xlu0 %498
  %v500 = vsel %vm78, %v412, 0.0
  %501 = vadd.xlane.f32.xlu0 %v500
  %v502 = vpop.xlane.xlu0 %501
  %v503 = vsel %vm78, %v413, 0.0
  %504 = vadd.xlane.f32.xlu0 %v503
  %v505 = vpop.xlane.xlu0 %504
  %v506 = vsel %vm78, %v414, 0.0
  %507 = vadd.xlane.f32.xlu0 %v506
  %v508 = vpop.xlane.xlu0 %507
  %v509 = vsel %vm78, %v415, 0.0
  %510 = vadd.xlane.f32.xlu0 %v509
  %v511 = vpop.xlane.xlu0 %510
  %v512 = vsel %vm78, %v416, 0.0
  %513 = vadd.xlane.f32.xlu0 %v512
  %v514 = vpop.xlane.xlu0 %513
  %v515 = vsel %vm78, %v417, 0.0
  %516 = vadd.xlane.f32.xlu0 %v515
  %v517 = vpop.xlane.xlu0 %516
  %v518 = vsel %vm78, %v418, 0.0
  %519 = vadd.xlane.f32.xlu0 %v518
  %v520 = vpop.xlane.xlu0 %519
  %v521 = vsel %vm78, %v419, 0.0
  %522 = vadd.xlane.f32.xlu0 %v521
  %v523 = vpop.xlane.xlu0 %522
  %v524 = vsel %vm78, %v420, 0.0
  %525 = vadd.xlane.f32.xlu0 %v524
  %v526 = vpop.xlane.xlu0 %525
  %v527 = vsel %vm78, %v421, 0.0
  %528 = vadd.xlane.f32.xlu0 %v527
  %v529 = vpop.xlane.xlu0 %528
  %v530 = vsel %vm78, %v422, 0.0
  %531 = vadd.xlane.f32.xlu0 %v530
  %v532 = vpop.xlane.xlu0 %531
  %v533 = vsel %vm78, %v423, 0.0
  %534 = vadd.xlane.f32.xlu0 %v533
  %v535 = vpop.xlane.xlu0 %534
  %v536 = vsel %vm78, %v424, 0.0
  %537 = vadd.xlane.f32.xlu0 %v536
  %v538 = vpop.xlane.xlu0 %537
  %v539 = vsel %vm78, %v425, 0.0
  %540 = vadd.xlane.f32.xlu0 %v539
  %v541 = vpop.xlane.xlu0 %540
  %v542 = vsel %vm78, %v426, 0.0
  %543 = vadd.xlane.f32.xlu0 %v542
  %v544 = vpop.xlane.xlu0 %543
  %v545 = vsel %vm78, %v427, 0.0
  %546 = vadd.xlane.f32.xlu0 %v545
  %v547 = vpop.xlane.xlu0 %546
  %v548 = vsel %vm78, %v428, 0.0
  %549 = vadd.xlane.f32.xlu0 %v548
  %v550 = vpop.xlane.xlu0 %549
  %v551 = vsel %vm78, %v429, 0.0
  %552 = vadd.xlane.f32.xlu0 %v551
  %v553 = vpop.xlane.xlu0 %552
  %v554 = vsel %vm78, %v430, 0.0
  %555 = vadd.xlane.f32.xlu0 %v554
  %v556 = vpop.xlane.xlu0 %555
  %v557 = vsel %vm78, %v431, 0.0
  %558 = vadd.xlane.f32.xlu0 %v557
  %v559 = vpop.xlane.xlu0 %558
  %v560 = vsel %vm78, %v432, 0.0
  %561 = vadd.xlane.f32.xlu0 %v560
  %v562 = vpop.xlane.xlu0 %561
  %v563 = vsel %vm78, %v433, 0.0
  %564 = vadd.xlane.f32.xlu0 %v563
  %v565 = vpop.xlane.xlu0 %564
  %v566 = vsel %vm78, %v434, 0.0
  %567 = vadd.xlane.f32.xlu0 %v566
  %v568 = vpop.xlane.xlu0 %567
  %v569 = vsel %vm78, %v435, 0.0
  %570 = vadd.xlane.f32.xlu0 %v569
  %v571 = vpop.xlane.xlu0 %570
  %v572 = vsel %vm78, %v436, 0.0
  %573 = vadd.xlane.f32.xlu0 %v572
  %v574 = vpop.xlane.xlu0 %573
  %v575 = vsel %vm78, %v437, 0.0
  %576 = vadd.xlane.f32.xlu0 %v575
  %v577 = vpop.xlane.xlu0 %576
  %v578 = vsel %vm78, %v438, 0.0
  %579 = vadd.xlane.f32.xlu0 %v578
  %v580 = vpop.xlane.xlu0 %579
  %v581 = vsel %vm78, %v439, 0.0
  %582 = vadd.xlane.f32.xlu0 %v581
  %v583 = vpop.xlane.xlu0 %582
  %v584 = vsel %vm78, %v440, 0.0
  %585 = vadd.xlane.f32.xlu0 %v584
  %v586 = vpop.xlane.xlu0 %585
  %v587 = vsel %vm78, %v441, 0.0
  %588 = vadd.xlane.f32.xlu0 %v587
  %v589 = vpop.xlane.xlu0 %588
  %v590 = vsel %vm78, %v442, 0.0
  %591 = vadd.xlane.f32.xlu0 %v590
  %v592 = vpop.xlane.xlu0 %591
  %v593 = vsel %vm78, %v443, 0.0
  %594 = vadd.xlane.f32.xlu0 %v593
  %v595 = vpop.xlane.xlu0 %594
  %v596 = vsel %vm78, %v444, 0.0
  %597 = vadd.xlane.f32.xlu0 %v596
  %v598 = vpop.xlane.xlu0 %597
  %v599 = vsel %vm78, %v445, 0.0
  %600 = vadd.xlane.f32.xlu0 %v599
  %v601 = vpop.xlane.xlu0 %600
  %v602 = vsel %vm78, %v446, 0.0
  %603 = vadd.xlane.f32.xlu0 %v602
  %v604 = vpop.xlane.xlu0 %603
  %v605 = vsel %vm78, %v447, 0.0
  %606 = vadd.xlane.f32.xlu0 %v605
  %v607 = vpop.xlane.xlu0 %606
  %v608 = vsel %vm78, %v448, 0.0
  %609 = vadd.xlane.f32.xlu0 %v608
  %v610 = vpop.xlane.xlu0 %609
  %v611 = vsel %vm78, %v449, 0.0
  %612 = vadd.xlane.f32.xlu0 %v611
  %v613 = vpop.xlane.xlu0 %612
  %v614 = vsel %vm78, %v450, 0.0
  %615 = vadd.xlane.f32.xlu0 %v614
  %v616 = vpop.xlane.xlu0 %615
  %v617 = vsel %vm78, %v451, 0.0
  %618 = vadd.xlane.f32.xlu0 %v617
  %v619 = vpop.xlane.xlu0 %618
  %v620 = vsel %vm78, %v452, 0.0
  %621 = vadd.xlane.f32.xlu0 %v620
  %v622 = vpop.xlane.xlu0 %621
  %v623 = vsel %vm78, %v453, 0.0
  %624 = vadd.xlane.f32.xlu0 %v623
  %v625 = vpop.xlane.xlu0 %624
  %v626 = vsel %vm78, %v454, 0.0
  %627 = vadd.xlane.f32.xlu0 %v626
  %v628 = vpop.xlane.xlu0 %627
  %v629 = vsel %vm78, %v455, 0.0
  %630 = vadd.xlane.f32.xlu0 %v629
  %v631 = vpop.xlane.xlu0 %630
  %v632 = vsel %vm78, %v456, 0.0
  %633 = vadd.xlane.f32.xlu0 %v632
  %v634 = vpop.xlane.xlu0 %633
  %v635 = vsel %vm78, %v457, 0.0
  %636 = vadd.xlane.f32.xlu0 %v635
  %v637 = vpop.xlane.xlu0 %636
  %v638 = vsel %vm78, %v458, 0.0
  %639 = vadd.xlane.f32.xlu0 %v638
  %v640 = vpop.xlane.xlu0 %639
  %v641 = vsel %vm78, %v459, 0.0
  %642 = vadd.xlane.f32.xlu0 %v641
  %v643 = vpop.xlane.xlu0 %642
  %v644 = vsel %vm78, %v460, 0.0
  %645 = vadd.xlane.f32.xlu0 %v644
  %v646 = vpop.xlane.xlu0 %645
  %v647 = vsel %vm78, %v461, 0.0
  %648 = vadd.xlane.f32.xlu0 %v647
  %v649 = vpop.xlane.xlu0 %648
  %v650 = vsel %vm78, %v462, 0.0
  %651 = vadd.xlane.f32.xlu0 %v650
  %v652 = vpop.xlane.xlu0 %651
  %v653 = vsel %vm78, %v463, 0.0
  %654 = vadd.xlane.f32.xlu0 %v653
  %v655 = vpop.xlane.xlu0 %654
  %v656 = vmul.f32 %v466, %v271
  %v657 = vmul.f32 %v469, %v271
  %v658 = vmul.f32 %v472, %v271
  %v659 = vmul.f32 %v475, %v271
  %v660 = vmul.f32 %v478, %v271
  %v661 = vmul.f32 %v481, %v271
  %v662 = vmul.f32 %v484, %v271
  %v663 = vmul.f32 %v487, %v271
  %v664 = vmul.f32 %v490, %v271
  %v665 = vmul.f32 %v493, %v271
  %v666 = vmul.f32 %v496, %v271
  %v667 = vmul.f32 %v499, %v271
  %v668 = vmul.f32 %v502, %v271
  %v669 = vmul.f32 %v505, %v271
  %v670 = vmul.f32 %v508, %v271
  %v671 = vmul.f32 %v511, %v271
  %v672 = vmul.f32 %v514, %v271
  %v673 = vmul.f32 %v517, %v271
  %v674 = vmul.f32 %v520, %v271
  %v675 = vmul.f32 %v523, %v271
  %v676 = vmul.f32 %v526, %v271
  %v677 = vmul.f32 %v529, %v271
  %v678 = vmul.f32 %v532, %v271
  %v679 = vmul.f32 %v535, %v271
  %v680 = vmul.f32 %v538, %v271
  %v681 = vmul.f32 %v541, %v271
  %v682 = vmul.f32 %v544, %v271
  %v683 = vmul.f32 %v547, %v271
  %v684 = vmul.f32 %v550, %v271
  %v685 = vmul.f32 %v553, %v271
  %v686 = vmul.f32 %v556, %v271
  %v687 = vmul.f32 %v559, %v271
  %v688 = vmul.f32 %v562, %v271
  %v689 = vmul.f32 %v565, %v271
  %v690 = vmul.f32 %v568, %v271
  %v691 = vmul.f32 %v571, %v271
  %v692 = vmul.f32 %v574, %v271
  %v693 = vmul.f32 %v577, %v271
  %v694 = vmul.f32 %v580, %v271
  %v695 = vmul.f32 %v583, %v271
  %v696 = vmul.f32 %v586, %v271
  %v697 = vmul.f32 %v589, %v271
  %v698 = vmul.f32 %v592, %v271
  %v699 = vmul.f32 %v595, %v271
  %v700 = vmul.f32 %v598, %v271
  %v701 = vmul.f32 %v601, %v271
  %v702 = vmul.f32 %v604, %v271
  %v703 = vmul.f32 %v607, %v271
  %v704 = vmul.f32 %v610, %v271
  %v705 = vmul.f32 %v613, %v271
  %v706 = vmul.f32 %v616, %v271
  %v707 = vmul.f32 %v619, %v271
  %v708 = vmul.f32 %v622, %v271
  %v709 = vmul.f32 %v625, %v271
  %v710 = vmul.f32 %v628, %v271
  %v711 = vmul.f32 %v631, %v271
  %v712 = vmul.f32 %v634, %v271
  %v713 = vmul.f32 %v637, %v271
  %v714 = vmul.f32 %v640, %v271
  %v715 = vmul.f32 %v643, %v271
  %v716 = vmul.f32 %v646, %v271
  %v717 = vmul.f32 %v649, %v271
  %v718 = vmul.f32 %v652, %v271
  %v719 = vmul.f32 %v655, %v271
  %v720 = vadd.f32 %v656, 1e-06
  %v721 = vadd.f32 %v657, 1e-06
  %v722 = vadd.f32 %v658, 1e-06
  %v723 = vadd.f32 %v659, 1e-06
  %v724 = vadd.f32 %v660, 1e-06
  %v725 = vadd.f32 %v661, 1e-06
  %v726 = vadd.f32 %v662, 1e-06
  %v727 = vadd.f32 %v663, 1e-06
  %v728 = vadd.f32 %v664, 1e-06
  %v729 = vadd.f32 %v665, 1e-06
  %v730 = vadd.f32 %v666, 1e-06
  %v731 = vadd.f32 %v667, 1e-06
  %v732 = vadd.f32 %v668, 1e-06
  %v733 = vadd.f32 %v669, 1e-06
  %v734 = vadd.f32 %v670, 1e-06
  %v735 = vadd.f32 %v671, 1e-06
  %v736 = vadd.f32 %v672, 1e-06
  %v737 = vadd.f32 %v673, 1e-06
  %v738 = vadd.f32 %v674, 1e-06
  %v739 = vadd.f32 %v675, 1e-06
  %v740 = vadd.f32 %v676, 1e-06
  %v741 = vadd.f32 %v677, 1e-06
  %v742 = vadd.f32 %v678, 1e-06
  %v743 = vadd.f32 %v679, 1e-06
  %v744 = vadd.f32 %v680, 1e-06
  %v745 = vadd.f32 %v681, 1e-06
  %v746 = vadd.f32 %v682, 1e-06
  %v747 = vadd.f32 %v683, 1e-06
  %v748 = vadd.f32 %v684, 1e-06
  %v749 = vadd.f32 %v685, 1e-06
  %v750 = vadd.f32 %v686, 1e-06
  %v751 = vadd.f32 %v687, 1e-06
  %v752 = vadd.f32 %v688, 1e-06
  %v753 = vadd.f32 %v689, 1e-06
  %v754 = vadd.f32 %v690, 1e-06
  %v755 = vadd.f32 %v691, 1e-06
  %v756 = vadd.f32 %v692, 1e-06
  %v757 = vadd.f32 %v693, 1e-06
  %v758 = vadd.f32 %v694, 1e-06
  %v759 = vadd.f32 %v695, 1e-06
  %v760 = vadd.f32 %v696, 1e-06
  %v761 = vadd.f32 %v697, 1e-06
  %v762 = vadd.f32 %v698, 1e-06
  %v763 = vadd.f32 %v699, 1e-06
  %v764 = vadd.f32 %v700, 1e-06
  %v765 = vadd.f32 %v701, 1e-06
  %v766 = vadd.f32 %v702, 1e-06
  %v767 = vadd.f32 %v703, 1e-06
  %v768 = vadd.f32 %v704, 1e-06
  %v769 = vadd.f32 %v705, 1e-06
  %v770 = vadd.f32 %v706, 1e-06
  %v771 = vadd.f32 %v707, 1e-06
  %v772 = vadd.f32 %v708, 1e-06
  %v773 = vadd.f32 %v709, 1e-06
  %v774 = vadd.f32 %v710, 1e-06
  %v775 = vadd.f32 %v711, 1e-06
  %v776 = vadd.f32 %v712, 1e-06
  %v777 = vadd.f32 %v713, 1e-06
  %v778 = vadd.f32 %v714, 1e-06
  %v779 = vadd.f32 %v715, 1e-06
  %v780 = vadd.f32 %v716, 1e-06
  %v781 = vadd.f32 %v717, 1e-06
  %v782 = vadd.f32 %v718, 1e-06
  %v783 = vadd.f32 %v719, 1e-06
  %v784 = vrsqrt.pop %v720
  %v785 = vrsqrt.pop %v721
  %v786 = vrsqrt.pop %v722
  %v787 = vrsqrt.pop %v723
  %v788 = vrsqrt.pop %v724
  %v789 = vrsqrt.pop %v725
  %v790 = vrsqrt.pop %v726
  %v791 = vrsqrt.pop %v727
  %v792 = vrsqrt.pop %v728
  %v793 = vrsqrt.pop %v729
  %v794 = vrsqrt.pop %v730
  %v795 = vrsqrt.pop %v731
  %v796 = vrsqrt.pop %v732
  %v797 = vrsqrt.pop %v733
  %v798 = vrsqrt.pop %v734
  %v799 = vrsqrt.pop %v735
  %v800 = vrsqrt.pop %v736
  %v801 = vrsqrt.pop %v737
  %v802 = vrsqrt.pop %v738
  %v803 = vrsqrt.pop %v739
  %v804 = vrsqrt.pop %v740
  %v805 = vrsqrt.pop %v741
  %v806 = vrsqrt.pop %v742
  %v807 = vrsqrt.pop %v743
  %v808 = vrsqrt.pop %v744
  %v809 = vrsqrt.pop %v745
  %v810 = vrsqrt.pop %v746
  %v811 = vrsqrt.pop %v747
  %v812 = vrsqrt.pop %v748
  %v813 = vrsqrt.pop %v749
  %v814 = vrsqrt.pop %v750
  %v815 = vrsqrt.pop %v751
  %v816 = vrsqrt.pop %v752
  %v817 = vrsqrt.pop %v753
  %v818 = vrsqrt.pop %v754
  %v819 = vrsqrt.pop %v755
  %v820 = vrsqrt.pop %v756
  %v821 = vrsqrt.pop %v757
  %v822 = vrsqrt.pop %v758
  %v823 = vrsqrt.pop %v759
  %v824 = vrsqrt.pop %v760
  %v825 = vrsqrt.pop %v761
  %v826 = vrsqrt.pop %v762
  %v827 = vrsqrt.pop %v763
  %v828 = vrsqrt.pop %v764
  %v829 = vrsqrt.pop %v765
  %v830 = vrsqrt.pop %v766
  %v831 = vrsqrt.pop %v767
  %v832 = vrsqrt.pop %v768
  %v833 = vrsqrt.pop %v769
  %v834 = vrsqrt.pop %v770
  %v835 = vrsqrt.pop %v771
  %v836 = vrsqrt.pop %v772
  %v837 = vrsqrt.pop %v773
  %v838 = vrsqrt.pop %v774
  %v839 = vrsqrt.pop %v775
  %v840 = vrsqrt.pop %v776
  %v841 = vrsqrt.pop %v777
  %v842 = vrsqrt.pop %v778
  %v843 = vrsqrt.pop %v779
  %v844 = vrsqrt.pop %v780
  %v845 = vrsqrt.pop %v781
  %v846 = vrsqrt.pop %v782
  %v847 = vrsqrt.pop %v783
  %v848 = vmul.f32 %v336, %v784
  %v849 = vmul.f32 %v337, %v785
  %v850 = vmul.f32 %v338, %v786
  %v851 = vmul.f32 %v339, %v787
  %v852 = vmul.f32 %v340, %v788
  %v853 = vmul.f32 %v341, %v789
  %v854 = vmul.f32 %v342, %v790
  %v855 = vmul.f32 %v343, %v791
  %v856 = vmul.f32 %v344, %v792
  %v857 = vmul.f32 %v345, %v793
  %v858 = vmul.f32 %v346, %v794
  %v859 = vmul.f32 %v347, %v795
  %v860 = vmul.f32 %v348, %v796
  %v861 = vmul.f32 %v349, %v797
  %v862 = vmul.f32 %v350, %v798
  %v863 = vmul.f32 %v351, %v799
  %v864 = vmul.f32 %v352, %v800
  %v865 = vmul.f32 %v353, %v801
  %v866 = vmul.f32 %v354, %v802
  %v867 = vmul.f32 %v355, %v803
  %v868 = vmul.f32 %v356, %v804
  %v869 = vmul.f32 %v357, %v805
  %v870 = vmul.f32 %v358, %v806
  %v871 = vmul.f32 %v359, %v807
  %v872 = vmul.f32 %v360, %v808
  %v873 = vmul.f32 %v361, %v809
  %v874 = vmul.f32 %v362, %v810
  %v875 = vmul.f32 %v363, %v811
  %v876 = vmul.f32 %v364, %v812
  %v877 = vmul.f32 %v365, %v813
  %v878 = vmul.f32 %v366, %v814
  %v879 = vmul.f32 %v367, %v815
  %v880 = vmul.f32 %v368, %v816
  %v881 = vmul.f32 %v369, %v817
  %v882 = vmul.f32 %v370, %v818
  %v883 = vmul.f32 %v371, %v819
  %v884 = vmul.f32 %v372, %v820
  %v885 = vmul.f32 %v373, %v821
  %v886 = vmul.f32 %v374, %v822
  %v887 = vmul.f32 %v375, %v823
  %v888 = vmul.f32 %v376, %v824
  %v889 = vmul.f32 %v377, %v825
  %v890 = vmul.f32 %v378, %v826
  %v891 = vmul.f32 %v379, %v827
  %v892 = vmul.f32 %v380, %v828
  %v893 = vmul.f32 %v381, %v829
  %v894 = vmul.f32 %v382, %v830
  %v895 = vmul.f32 %v383, %v831
  %v896 = vmul.f32 %v384, %v832
  %v897 = vmul.f32 %v385, %v833
  %v898 = vmul.f32 %v386, %v834
  %v899 = vmul.f32 %v387, %v835
  %v900 = vmul.f32 %v388, %v836
  %v901 = vmul.f32 %v389, %v837
  %v902 = vmul.f32 %v390, %v838
  %v903 = vmul.f32 %v391, %v839
  %v904 = vmul.f32 %v392, %v840
  %v905 = vmul.f32 %v393, %v841
  %v906 = vmul.f32 %v394, %v842
  %v907 = vmul.f32 %v395, %v843
  %v908 = vmul.f32 %v396, %v844
  %v909 = vmul.f32 %v397, %v845
  %v910 = vmul.f32 %v398, %v846
  %v911 = vmul.f32 %v399, %v847
  %v912 = vld [vmem:[%s1] sm:$0x1]
  %v914 = vlaneseq
  %v915 = vshrl.u32 %v914, 7
  %v916 = vsub.s32 0, %v915
  %v917 = vrot.slane %v912, %v916
  %v919 = vmul.f32 %v848, %v917
  %v920 = vmul.f32 %v849, %v917
  %v921 = vmul.f32 %v850, %v917
  %v922 = vmul.f32 %v851, %v917
  %v923 = vmul.f32 %v852, %v917
  %v924 = vmul.f32 %v853, %v917
  %v925 = vmul.f32 %v854, %v917
  %v926 = vmul.f32 %v855, %v917
  %v927 = vmul.f32 %v856, %v917
  %v928 = vmul.f32 %v857, %v917
  %v929 = vmul.f32 %v858, %v917
  %v930 = vmul.f32 %v859, %v917
  %v931 = vmul.f32 %v860, %v917
  %v932 = vmul.f32 %v861, %v917
  %v933 = vmul.f32 %v862, %v917
  %v934 = vmul.f32 %v863, %v917
  %v935 = vmul.f32 %v864, %v917
  %v936 = vmul.f32 %v865, %v917
  %v937 = vmul.f32 %v866, %v917
  %v938 = vmul.f32 %v867, %v917
  %v939 = vmul.f32 %v868, %v917
  %v940 = vmul.f32 %v869, %v917
  %v941 = vmul.f32 %v870, %v917
  %v942 = vmul.f32 %v871, %v917
  %v943 = vmul.f32 %v872, %v917
  %v944 = vmul.f32 %v873, %v917
  %v945 = vmul.f32 %v874, %v917
  %v946 = vmul.f32 %v875, %v917
  %v947 = vmul.f32 %v876, %v917
  %v948 = vmul.f32 %v877, %v917
  %v949 = vmul.f32 %v878, %v917
  %v950 = vmul.f32 %v879, %v917
  %v951 = vmul.f32 %v880, %v917
  %v952 = vmul.f32 %v881, %v917
  %v953 = vmul.f32 %v882, %v917
  %v954 = vmul.f32 %v883, %v917
  %v955 = vmul.f32 %v884, %v917
  %v956 = vmul.f32 %v885, %v917
  %v957 = vmul.f32 %v886, %v917
  %v958 = vmul.f32 %v887, %v917
  %v959 = vmul.f32 %v888, %v917
  %v960 = vmul.f32 %v889, %v917
  %v961 = vmul.f32 %v890, %v917
  %v962 = vmul.f32 %v891, %v917
  %v963 = vmul.f32 %v892, %v917
  %v964 = vmul.f32 %v893, %v917
  %v965 = vmul.f32 %v894, %v917
  %v966 = vmul.f32 %v895, %v917
  %v967 = vmul.f32 %v896, %v917
  %v968 = vmul.f32 %v897, %v917
  %v969 = vmul.f32 %v898, %v917
  %v970 = vmul.f32 %v899, %v917
  %v971 = vmul.f32 %v900, %v917
  %v972 = vmul.f32 %v901, %v917
  %v973 = vmul.f32 %v902, %v917
  %v974 = vmul.f32 %v903, %v917
  %v975 = vmul.f32 %v904, %v917
  %v976 = vmul.f32 %v905, %v917
  %v977 = vmul.f32 %v906, %v917
  %v978 = vmul.f32 %v907, %v917
  %v979 = vmul.f32 %v908, %v917
  %v980 = vmul.f32 %v909, %v917
  %v981 = vmul.f32 %v910, %v917
  %v982 = vmul.f32 %v911, %v917
  %v983 = vld [vmem:[%s2] sm:$0x1]
  %v985 = vlaneseq
  %v986 = vshrl.u32 %v985, 7
  %v987 = vsub.s32 0, %v986
  %v988 = vrot.slane %v983, %v987
  %v990 = vadd.f32 %v919, %v988
  %v991 = vadd.f32 %v920, %v988
  %v992 = vadd.f32 %v921, %v988
  %v993 = vadd.f32 %v922, %v988
  %v994 = vadd.f32 %v923, %v988
  %v995 = vadd.f32 %v924, %v988
  %v996 = vadd.f32 %v925, %v988
  %v997 = vadd.f32 %v926, %v988
  %v998 = vadd.f32 %v927, %v988
  %v999 = vadd.f32 %v928, %v988
  %v1000 = vadd.f32 %v929, %v988
  %v1001 = vadd.f32 %v930, %v988
  %v1002 = vadd.f32 %v931, %v988
  %v1003 = vadd.f32 %v932, %v988
  %v1004 = vadd.f32 %v933, %v988
  %v1005 = vadd.f32 %v934, %v988
  %v1006 = vadd.f32 %v935, %v988
  %v1007 = vadd.f32 %v936, %v988
  %v1008 = vadd.f32 %v937, %v988
  %v1009 = vadd.f32 %v938, %v988
  %v1010 = vadd.f32 %v939, %v988
  %v1011 = vadd.f32 %v940, %v988
  %v1012 = vadd.f32 %v941, %v988
  %v1013 = vadd.f32 %v942, %v988
  %v1014 = vadd.f32 %v943, %v988
  %v1015 = vadd.f32 %v944, %v988
  %v1016 = vadd.f32 %v945, %v988
  %v1017 = vadd.f32 %v946, %v988
  %v1018 = vadd.f32 %v947, %v988
  %v1019 = vadd.f32 %v948, %v988
  %v1020 = vadd.f32 %v949, %v988
  %v1021 = vadd.f32 %v950, %v988
  %v1022 = vadd.f32 %v951, %v988
  %v1023 = vadd.f32 %v952, %v988
  %v1024 = vadd.f32 %v953, %v988
  %v1025 = vadd.f32 %v954, %v988
  %v1026 = vadd.f32 %v955, %v988
  %v1027 = vadd.f32 %v956, %v988
  %v1028 = vadd.f32 %v957, %v988
  %v1029 = vadd.f32 %v958, %v988
  %v1030 = vadd.f32 %v959, %v988
  %v1031 = vadd.f32 %v960, %v988
  %v1032 = vadd.f32 %v961, %v988
  %v1033 = vadd.f32 %v962, %v988
  %v1034 = vadd.f32 %v963, %v988
  %v1035 = vadd.f32 %v964, %v988
  %v1036 = vadd.f32 %v965, %v988
  %v1037 = vadd.f32 %v966, %v988
  %v1038 = vadd.f32 %v967, %v988
  %v1039 = vadd.f32 %v968, %v988
  %v1040 = vadd.f32 %v969, %v988
  %v1041 = vadd.f32 %v970, %v988
  %v1042 = vadd.f32 %v971, %v988
  %v1043 = vadd.f32 %v972, %v988
  %v1044 = vadd.f32 %v973, %v988
  %v1045 = vadd.f32 %v974, %v988
  %v1046 = vadd.f32 %v975, %v988
  %v1047 = vadd.f32 %v976, %v988
  %v1048 = vadd.f32 %v977, %v988
  %v1049 = vadd.f32 %v978, %v988
  %v1050 = vadd.f32 %v979, %v988
  %v1051 = vadd.f32 %v980, %v988
  %v1052 = vadd.f32 %v981, %v988
  %v1053 = vadd.f32 %v982, %v988
  %1054 = vst.msk [vmem:[%s3] sm:$0xff] %vm78, %v990
  %1055 = vst.msk [vmem:[%s3 + $0x8] sm:$0xff] %vm78, %v991
  %1056 = vst.msk [vmem:[%s3 + $0x10] sm:$0xff] %vm78, %v992
  %1057 = vst.msk [vmem:[%s3 + $0x18] sm:$0xff] %vm78, %v993
  %1058 = vst.msk [vmem:[%s3 + $0x20] sm:$0xff] %vm78, %v994
  %1059 = vst.msk [vmem:[%s3 + $0x28] sm:$0xff] %vm78, %v995
  %1060 = vst.msk [vmem:[%s3 + $0x30] sm:$0xff] %vm78, %v996
  %1061 = vst.msk [vmem:[%s3 + $0x38] sm:$0xff] %vm78, %v997
  %1062 = vst.msk [vmem:[%s3 + $0x40] sm:$0xff] %vm78, %v998
  %1063 = vst.msk [vmem:[%s3 + $0x48] sm:$0xff] %vm78, %v999
  %1064 = vst.msk [vmem:[%s3 + $0x50] sm:$0xff] %vm78, %v1000
  %1065 = vst.msk [vmem:[%s3 + $0x58] sm:$0xff] %vm78, %v1001
  %1066 = vst.msk [vmem:[%s3 + $0x60] sm:$0xff] %vm78, %v1002
  %1067 = vst.msk [vmem:[%s3 + $0x68] sm:$0xff] %vm78, %v1003
  %1068 = vst.msk [vmem:[%s3 + $0x70] sm:$0xff] %vm78, %v1004
  %1069 = vst.msk [vmem:[%s3 + $0x78] sm:$0xff] %vm78, %v1005
  %1070 = vst.msk [vmem:[%s3 + $0x80] sm:$0xff] %vm78, %v1006
  %1071 = vst.msk [vmem:[%s3 + $0x88] sm:$0xff] %vm78, %v1007
  %1072 = vst.msk [vmem:[%s3 + $0x90] sm:$0xff] %vm78, %v1008
  %1073 = vst.msk [vmem:[%s3 + $0x98] sm:$0xff] %vm78, %v1009
  %1074 = vst.msk [vmem:[%s3 + $0xa0] sm:$0xff] %vm78, %v1010
  %1075 = vst.msk [vmem:[%s3 + $0xa8] sm:$0xff] %vm78, %v1011
  %1076 = vst.msk [vmem:[%s3 + $0xb0] sm:$0xff] %vm78, %v1012
  %1077 = vst.msk [vmem:[%s3 + $0xb8] sm:$0xff] %vm78, %v1013
  %1078 = vst.msk [vmem:[%s3 + $0xc0] sm:$0xff] %vm78, %v1014
  %1079 = vst.msk [vmem:[%s3 + $0xc8] sm:$0xff] %vm78, %v1015
  %1080 = vst.msk [vmem:[%s3 + $0xd0] sm:$0xff] %vm78, %v1016
  %1081 = vst.msk [vmem:[%s3 + $0xd8] sm:$0xff] %vm78, %v1017
  %1082 = vst.msk [vmem:[%s3 + $0xe0] sm:$0xff] %vm78, %v1018
  %1083 = vst.msk [vmem:[%s3 + $0xe8] sm:$0xff] %vm78, %v1019
  %1084 = vst.msk [vmem:[%s3 + $0xf0] sm:$0xff] %vm78, %v1020
  %1085 = vst.msk [vmem:[%s3 + $0xf8] sm:$0xff] %vm78, %v1021
  %1086 = vst.msk [vmem:[%s3 + $0x100] sm:$0xff] %vm78, %v1022
  %1087 = vst.msk [vmem:[%s3 + $0x108] sm:$0xff] %vm78, %v1023
  %1088 = vst.msk [vmem:[%s3 + $0x110] sm:$0xff] %vm78, %v1024
  %1089 = vst.msk [vmem:[%s3 + $0x118] sm:$0xff] %vm78, %v1025
  %1090 = vst.msk [vmem:[%s3 + $0x120] sm:$0xff] %vm78, %v1026
  %1091 = vst.msk [vmem:[%s3 + $0x128] sm:$0xff] %vm78, %v1027
  %1092 = vst.msk [vmem:[%s3 + $0x130] sm:$0xff] %vm78, %v1028
  %1093 = vst.msk [vmem:[%s3 + $0x138] sm:$0xff] %vm78, %v1029
  %1094 = vst.msk [vmem:[%s3 + $0x140] sm:$0xff] %vm78, %v1030
  %1095 = vst.msk [vmem:[%s3 + $0x148] sm:$0xff] %vm78, %v1031
  %1096 = vst.msk [vmem:[%s3 + $0x150] sm:$0xff] %vm78, %v1032
  %1097 = vst.msk [vmem:[%s3 + $0x158] sm:$0xff] %vm78, %v1033
  %1098 = vst.msk [vmem:[%s3 + $0x160] sm:$0xff] %vm78, %v1034
  %1099 = vst.msk [vmem:[%s3 + $0x168] sm:$0xff] %vm78, %v1035
  %1100 = vst.msk [vmem:[%s3 + $0x170] sm:$0xff] %vm78, %v1036
  %1101 = vst.msk [vmem:[%s3 + $0x178] sm:$0xff] %vm78, %v1037
  %1102 = vst.msk [vmem:[%s3 + $0x180] sm:$0xff] %vm78, %v1038
  %1103 = vst.msk [vmem:[%s3 + $0x188] sm:$0xff] %vm78, %v1039
  %1104 = vst.msk [vmem:[%s3 + $0x190] sm:$0xff] %vm78, %v1040
  %1105 = vst.msk [vmem:[%s3 + $0x198] sm:$0xff] %vm78, %v1041
  %1106 = vst.msk [vmem:[%s3 + $0x1a0] sm:$0xff] %vm78, %v1042
  %1107 = vst.msk [vmem:[%s3 + $0x1a8] sm:$0xff] %vm78, %v1043
  %1108 = vst.msk [vmem:[%s3 + $0x1b0] sm:$0xff] %vm78, %v1044
  %1109 = vst.msk [vmem:[%s3 + $0x1b8] sm:$0xff] %vm78, %v1045
  %1110 = vst.msk [vmem:[%s3 + $0x1c0] sm:$0xff] %vm78, %v1046
  %1111 = vst.msk [vmem:[%s3 + $0x1c8] sm:$0xff] %vm78, %v1047
  %1112 = vst.msk [vmem:[%s3 + $0x1d0] sm:$0xff] %vm78, %v1048
  %1113 = vst.msk [vmem:[%s3 + $0x1d8] sm:$0xff] %vm78, %v1049
  %1114 = vst.msk [vmem:[%s3 + $0x1e0] sm:$0xff] %vm78, %v1050
  %1115 = vst.msk [vmem:[%s3 + $0x1e8] sm:$0xff] %vm78, %v1051
  %1116 = vst.msk [vmem:[%s3 + $0x1f0] sm:$0xff] %vm78, %v1052
  %1117 = vst.msk [vmem:[%s3 + $0x1f8] sm:$0xff] %vm78, %v1053
  // Predicated region
  $region14: #{tpu_custom_call.1} parent=0 // pred_check
    _
  $region15: #{tpu_custom_call.1} parent=0 // pred_check_branch
    %1119 = sbr.rel (0) target = $region17
  $region16: #{tpu_custom_call.1} parent=0 // pred_region
    _
  $region17: #{tpu_custom_call.1} parent=0 // pred_fallthru
    _
  // Predicated region
  $region18: #{tpu_custom_call.1} parent=0 // pred_check
    _
  $region19: #{tpu_custom_call.1} parent=0 // pred_check_branch
    %1121 = sbr.rel (0) target = $region21
  $region20: #{tpu_custom_call.1} parent=0 // pred_region
    _
  $region21: #{tpu_custom_call.1} parent=0 // pred_fallthru
    _

</llo_original>
